<compile_context>
chip_gen: v7x
topology: tpu7x:2x2x1
jax: 0.10.0
libtpu: 0.0.40
codegen_flags: <defaults>
</compile_context>

<pallas_src>
import functools

import jax
import jax.numpy as jnp
from jax.experimental import pallas as pl
from jax.experimental.pallas import tpu as pltpu


def _olr_cdf_kernel(x_ref, w1_ref, b1_ref, w2_ref, b2_ref, w3_ref, b3_ref,
                    o_ref, *, matmul_dtype, approx_sigmoid):
    """Fused 3-layer MLP + folded ordinal intercepts + sigmoid on one batch tile.

    Batch-major layout: x_ref is (tile_b, n_in); every matmul is
    (tile_b, K) @ (K, N) with f32 accumulation on the MXU.
    """
    x = x_ref[...]                                                   # (tb, n_in) f32
    if matmul_dtype is not None:
        x = x.astype(matmul_dtype)                                   # in-kernel cast only

    # Layer 0: x @ W1 + b1, ReLU
    h = jnp.dot(x, w1_ref[...], preferred_element_type=jnp.float32) + b1_ref[...]
    h = jnp.maximum(h, 0.0)                                          # (tb, nh) f32
    if matmul_dtype is not None:
        h = h.astype(matmul_dtype)

    # Layer 1: h @ W2 + b2, ReLU
    h = jnp.dot(h, w2_ref[...], preferred_element_type=jnp.float32) + b2_ref[...]
    h = jnp.maximum(h, 0.0)                                          # (tb, nh) f32
    if matmul_dtype is not None:
        h = h.astype(matmul_dtype)

    # Layer 2 folded with the ordinal intercepts:
    #   original: z = h @ w3 + b3 (tb,1);  logits = z + intercepts (broadcast)
    #   folded  : logits = h @ tile(w3, n_out) + (b3 + intercepts)  (tb, n_out)
    z = jnp.dot(h, w3_ref[...], preferred_element_type=jnp.float32) + b3_ref[...]

    if approx_sigmoid:
        # exp rides the EUP; approx reciprocal avoids the VPU Newton divide.
        p = pl.reciprocal(1.0 + jnp.exp(-z), approx=True)
    else:
        p = jax.nn.sigmoid(z)
    o_ref[...] = p.astype(o_ref.dtype)


def _round_up(v, m):
    return ((v + m - 1) // m) * m


def olr_cdf_forward(x, w1, b1, w2, b2, w3, b3, intercepts, *,
                    tile_b=8192, matmul_dtype=None, approx_sigmoid=False,
                    vmem_limit_bytes=48 * 1024 * 1024):
    """Pallas wrapper.

    x:          (B, n_dim_input) float32
    w1/b1:      (n_dim_input, n_hidden) / (1, n_hidden)
    w2/b2:      (n_hidden, n_hidden)    / (1, n_hidden)
    w3/b3:      (n_hidden, 1)           / (1, 1)
    intercepts: (1, n_output)
    returns:    (B, n_output) float32

    Weights are stored (in_features, out_features), i.e. the math is x @ W + b,
    equivalent to PyTorch's x @ W_pt.T + b.
    """
    B, n_in = x.shape
    n_hidden = w1.shape[1]
    n_output = intercepts.shape[-1]

    x = jnp.asarray(x, jnp.float32)

    # --- Fold final linear layer with the intercept broadcast (same math):
    #     (h @ w3 + b3) + intercepts == h @ tile(w3, n_out) + (b3 + intercepts)
    w3_rep = jnp.tile(jnp.reshape(jnp.asarray(w3, jnp.float32), (n_hidden, 1)),
                      (1, n_output))                                     # (nh, n_out)
    b3_rep = (jnp.reshape(jnp.asarray(b3, jnp.float32), (1, 1))
              + jnp.reshape(jnp.asarray(intercepts, jnp.float32), (1, n_output)))

    # Weight casts (tiny, constant-foldable) stay in the wrapper; x is NOT cast here.
    wdt = jnp.float32 if matmul_dtype is None else matmul_dtype
    w1c = jnp.asarray(w1, jnp.float32).astype(wdt)                       # (n_in, nh)
    w2c = jnp.asarray(w2, jnp.float32).astype(wdt)                       # (nh, nh)
    w3c = w3_rep.astype(wdt)                                             # (nh, n_out)
    b1c = jnp.reshape(jnp.asarray(b1, jnp.float32), (1, n_hidden))
    b2c = jnp.reshape(jnp.asarray(b2, jnp.float32), (1, n_hidden))

    # --- Batch tile sizing: sublane-aligned, clamped to the batch, no host pad.
    SUB = 8
    b_ceil = _round_up(B, SUB)
    tb = max(SUB, (int(tile_b) // SUB) * SUB)
    tb = min(tb, b_ceil)
    # v7x megacore: make sure there are >= 2 grid steps when the batch is big
    # enough to split (dimension_semantics=("parallel",) shards them over TCs).
    if b_ceil >= 256:
        tb = min(tb, _round_up(pl.cdiv(B, 2), SUB))
    grid = (pl.cdiv(B, tb),)    # ragged last block handled by Pallas masking

    kernel = functools.partial(_olr_cdf_kernel,
                               matmul_dtype=matmul_dtype,
                               approx_sigmoid=approx_sigmoid)

    # Constant block index -> weights/biases stay VMEM-resident across the grid.
    const = lambda r, c: pl.BlockSpec((r, c), lambda i: (0, 0))

    out = pl.pallas_call(
        kernel,
        out_shape=jax.ShapeDtypeStruct((B, n_output), jnp.float32),
        grid_spec=pltpu.PrefetchScalarGridSpec(
            num_scalar_prefetch=0,
            grid=grid,
            in_specs=[
                pl.BlockSpec((tb, n_in), lambda i: (i, 0)),   # x batch tile
                const(n_in, n_hidden),                        # W1
                const(1, n_hidden),                           # b1
                const(n_hidden, n_hidden),                    # W2
                const(1, n_hidden),                           # b2
                const(n_hidden, n_output),                    # folded W3
                const(1, n_output),                           # folded b3 + intercepts
            ],
            out_specs=pl.BlockSpec((tb, n_output), lambda i: (i, 0)),
        ),
        compiler_params=pltpu.CompilerParams(
            dimension_semantics=("parallel",),
            vmem_limit_bytes=int(vmem_limit_bytes)),
    )(x, w1c, b1c, w2c, b2c, w3c, b3_rep)

    return out                                                    # (B, n_output)


def _reference(x, w1, b1, w2, b2, w3, b3, intercepts):
    h = jnp.maximum(x @ w1 + b1, 0.0)
    h = jnp.maximum(h @ w2 + b2, 0.0)
    z = h @ w3 + b3
    return jax.nn.sigmoid(z + intercepts)


if __name__ == "__main__":
    # Module hyperparameters (small, consistent with the PyTorch __init__ defaults).
    n_dim_input = 16
    n_output = 8
    n_dim_hidden = int(n_output * n_dim_input // 2)   # default hidden width: 64
    batch = 300   # small; exercises the 2-grid-step split and a ragged last block

    key = jax.random.PRNGKey(0)
    k_x, k1, k2, k3, kb1, kb2, kb3 = jax.random.split(key, 7)

    # Deterministic init mimicking nn.Linear's U(-1/sqrt(fan_in), 1/sqrt(fan_in)).
    def lin_init(kw, kb, n_in_, n_out_):
        bound = 1.0 / jnp.sqrt(jnp.float32(n_in_))
        w = jax.random.uniform(kw, (n_in_, n_out_), jnp.float32, -bound, bound)
        b = jax.random.uniform(kb, (1, n_out_), jnp.float32, -bound, bound)
        return w, b

    w1, b1 = lin_init(k1, kb1, n_dim_input, n_dim_hidden)
    w2, b2 = lin_init(k2, kb2, n_dim_hidden, n_dim_hidden)
    w3, b3 = lin_init(k3, kb3, n_dim_hidden, 1)

    # intercepts = cumsum(softplus(ones(1, n_output)))  (parameter value at init).
    base_intercepts = jnp.ones((1, n_output), jnp.float32)
    intercepts = jnp.cumsum(jax.nn.softplus(base_intercepts), axis=-1)

    x = jax.random.normal(k_x, (batch, n_dim_input), jnp.float32)

    ref = _reference(x, w1, b1, w2, b2, w3, b3, intercepts)

    # f32 path (default): 2 grid steps, ragged last block.
    out = olr_cdf_forward(x, w1, b1, w2, b2, w3, b3, intercepts)
    out = jax.block_until_ready(out)
    assert out.shape == (batch, n_output)
    assert jnp.allclose(out, ref, atol=1e-5, rtol=1e-5), \
        float(jnp.max(jnp.abs(out - ref)))

    # Tiny-batch / single-block path.
    out_small = olr_cdf_forward(x[:16], w1, b1, w2, b2, w3, b3, intercepts)
    out_small = jax.block_until_ready(out_small)
    assert jnp.allclose(out_small, ref[:16], atol=1e-5, rtol=1e-5)

    # Reduced-precision MXU + approx-sigmoid path (v6e/v7x VMEM/HBM optimization).
    out_fast = olr_cdf_forward(x, w1, b1, w2, b2, w3, b3, intercepts,
                               matmul_dtype=jnp.bfloat16, approx_sigmoid=True)
    out_fast = jax.block_until_ready(out_fast)
    assert jnp.allclose(out_fast, ref, atol=5e-2, rtol=0.0)

    print("KERNEL_OK")
</pallas_src>

<mosaic_0001>
module attributes {stable_mosaic.version = 11 : i64} {
  func.func @_olr_cdf_kernel(%arg0: i32, %arg1: memref<152x16xf32, #tpu.memory_space<vmem>>, %arg2: memref<16x64xf32, #tpu.memory_space<vmem>>, %arg3: memref<1x64xf32, #tpu.memory_space<vmem>>, %arg4: memref<64x64xf32, #tpu.memory_space<vmem>>, %arg5: memref<1x64xf32, #tpu.memory_space<vmem>>, %arg6: memref<64x8xf32, #tpu.memory_space<vmem>>, %arg7: memref<1x8xf32, #tpu.memory_space<vmem>>, %arg8: memref<152x8xf32, #tpu.memory_space<vmem>>) attributes {dimension_semantics = [#tpu.dimension_semantics<parallel>], iteration_bounds = array<i64: 2>, scalar_prefetch = 0 : i64, scratch_operands = 0 : i64, tpu.core_type = #tpu.core_type<tc>, window_params = [{transform_indices = @transform_0, window_bounds = array<i64: 152, 16>}, {pipeline_mode = #tpu.pipeline_mode<synchronous>, transform_indices = @transform_1, window_bounds = array<i64: 16, 64>}, {pipeline_mode = #tpu.pipeline_mode<synchronous>, transform_indices = @transform_2, window_bounds = array<i64: 1, 64>}, {pipeline_mode = #tpu.pipeline_mode<synchronous>, transform_indices = @transform_3, window_bounds = array<i64: 64, 64>}, {pipeline_mode = #tpu.pipeline_mode<synchronous>, transform_indices = @transform_4, window_bounds = array<i64: 1, 64>}, {pipeline_mode = #tpu.pipeline_mode<synchronous>, transform_indices = @transform_5, window_bounds = array<i64: 64, 8>}, {pipeline_mode = #tpu.pipeline_mode<synchronous>, transform_indices = @transform_6, window_bounds = array<i64: 1, 8>}, {transform_indices = @transform_7, window_bounds = array<i64: 152, 8>}]} {
    %c0 = arith.constant 0 : index
    %c0_0 = arith.constant 0 : index
    %0 = vector.load %arg1[%c0, %c0_0] : memref<152x16xf32, #tpu.memory_space<vmem>>, vector<152x16xf32>
    %c0_1 = arith.constant 0 : index
    %c0_2 = arith.constant 0 : index
    %1 = vector.load %arg2[%c0_1, %c0_2] : memref<16x64xf32, #tpu.memory_space<vmem>>, vector<16x64xf32>
    %cst = arith.constant dense<0.000000e+00> : vector<152x64xf32>
    %2 = tpu.matmul %0, %1, %cst {dimension_numbers = #tpu.dot_dimension_numbers<[1], [0], [0], [1], [0, 0, 1, 1], [], []>} : vector<152x16xf32>, vector<16x64xf32>, vector<152x64xf32> -> vector<152x64xf32>
    %c0_3 = arith.constant 0 : index
    %c0_4 = arith.constant 0 : index
    %3 = vector.load %arg3[%c0_3, %c0_4] : memref<1x64xf32, #tpu.memory_space<vmem>>, vector<1x64xf32>
    %4 = vector.broadcast %3 : vector<1x64xf32> to vector<152x64xf32>
    %5 = arith.addf %2, %4 : vector<152x64xf32>
    %cst_5 = arith.constant 0.000000e+00 : f32
    %6 = vector.broadcast %cst_5 : f32 to vector<152x64xf32>
    %7 = arith.maximumf %5, %6 : vector<152x64xf32>
    %c0_6 = arith.constant 0 : index
    %c0_7 = arith.constant 0 : index
    %8 = vector.load %arg4[%c0_6, %c0_7] : memref<64x64xf32, #tpu.memory_space<vmem>>, vector<64x64xf32>
    %cst_8 = arith.constant dense<0.000000e+00> : vector<152x64xf32>
    %9 = tpu.matmul %7, %8, %cst_8 {dimension_numbers = #tpu.dot_dimension_numbers<[1], [0], [0], [1], [0, 0, 1, 1], [], []>} : vector<152x64xf32>, vector<64x64xf32>, vector<152x64xf32> -> vector<152x64xf32>
    %c0_9 = arith.constant 0 : index
    %c0_10 = arith.constant 0 : index
    %10 = vector.load %arg5[%c0_9, %c0_10] : memref<1x64xf32, #tpu.memory_space<vmem>>, vector<1x64xf32>
    %11 = vector.broadcast %10 : vector<1x64xf32> to vector<152x64xf32>
    %12 = arith.addf %9, %11 : vector<152x64xf32>
    %cst_11 = arith.constant 0.000000e+00 : f32
    %13 = vector.broadcast %cst_11 : f32 to vector<152x64xf32>
    %14 = arith.maximumf %12, %13 : vector<152x64xf32>
    %c0_12 = arith.constant 0 : index
    %c0_13 = arith.constant 0 : index
    %15 = vector.load %arg6[%c0_12, %c0_13] : memref<64x8xf32, #tpu.memory_space<vmem>>, vector<64x8xf32>
    %cst_14 = arith.constant dense<0.000000e+00> : vector<152x8xf32>
    %16 = tpu.matmul %14, %15, %cst_14 {dimension_numbers = #tpu.dot_dimension_numbers<[1], [0], [0], [1], [0, 0, 1, 1], [], []>} : vector<152x64xf32>, vector<64x8xf32>, vector<152x8xf32> -> vector<152x8xf32>
    %c0_15 = arith.constant 0 : index
    %c0_16 = arith.constant 0 : index
    %17 = vector.load %arg7[%c0_15, %c0_16] : memref<1x8xf32, #tpu.memory_space<vmem>>, vector<1x8xf32>
    %18 = vector.broadcast %17 : vector<1x8xf32> to vector<152x8xf32>
    %19 = arith.addf %16, %18 : vector<152x8xf32>
    %20 = arith.negf %19 : vector<152x8xf32>
    %21 = math.exp %20 : vector<152x8xf32>
    %cst_17 = arith.constant 1.000000e+00 : f32
    %22 = vector.broadcast %cst_17 : f32 to vector<152x8xf32>
    %23 = arith.addf %22, %21 : vector<152x8xf32>
    %24 = arith.divf %22, %23 : vector<152x8xf32>
    %c0_18 = arith.constant 0 : index
    %c0_19 = arith.constant 0 : index
    %25 = vector.load %arg8[%c0_18, %c0_19] : memref<152x8xf32, #tpu.memory_space<vmem>>, vector<152x8xf32>
    tpu.vector_store %arg8[%c0_18, %c0_19], %24 {strides = array<i32>} : memref<152x8xf32, #tpu.memory_space<vmem>>, vector<152x8xf32>,
    return
  }
  func.func @transform_0(%arg0: i32) -> (i32, i32) {
    %c0_i32 = arith.constant 0 : i32
    %c0_i32_0 = arith.constant 0 : i32
    return %arg0, %c0_i32 : i32, i32
  }
  func.func @transform_1(%arg0: i32) -> (i32, i32) {
    %c0_i32 = arith.constant 0 : i32
    %c0_i32_0 = arith.constant 0 : i32
    %c0_i32_1 = arith.constant 0 : i32
    return %c0_i32, %c0_i32_0 : i32, i32
  }
  func.func @transform_2(%arg0: i32) -> (i32, i32) {
    %c0_i32 = arith.constant 0 : i32
    %c0_i32_0 = arith.constant 0 : i32
    %c0_i32_1 = arith.constant 0 : i32
    return %c0_i32, %c0_i32_0 : i32, i32
  }
  func.func @transform_3(%arg0: i32) -> (i32, i32) {
    %c0_i32 = arith.constant 0 : i32
    %c0_i32_0 = arith.constant 0 : i32
    %c0_i32_1 = arith.constant 0 : i32
    return %c0_i32, %c0_i32_0 : i32, i32
  }
  func.func @transform_4(%arg0: i32) -> (i32, i32) {
    %c0_i32 = arith.constant 0 : i32
    %c0_i32_0 = arith.constant 0 : i32
    %c0_i32_1 = arith.constant 0 : i32
    return %c0_i32, %c0_i32_0 : i32, i32
  }
  func.func @transform_5(%arg0: i32) -> (i32, i32) {
    %c0_i32 = arith.constant 0 : i32
    %c0_i32_0 = arith.constant 0 : i32
    %c0_i32_1 = arith.constant 0 : i32
    return %c0_i32, %c0_i32_0 : i32, i32
  }
  func.func @transform_6(%arg0: i32) -> (i32, i32) {
    %c0_i32 = arith.constant 0 : i32
    %c0_i32_0 = arith.constant 0 : i32
    %c0_i32_1 = arith.constant 0 : i32
    return %c0_i32, %c0_i32_0 : i32, i32
  }
  func.func @transform_7(%arg0: i32) -> (i32, i32) {
    %c0_i32 = arith.constant 0 : i32
    %c0_i32_0 = arith.constant 0 : i32
    return %arg0, %c0_i32 : i32, i32
  }
}

</mosaic_0001>

<llo_original>
// kernel: tpu_custom_call.1
$region0: #{tpu_custom_call.1}
  #allocation0 [shape = 'u32[]', space=smem, size = 0x4, offset = 0x4, fixed_abs, tag = 'smem constant byte address 0x4 - core index']
  #allocation1 [shape = 'u32[144,128]{1,0:T(1,128)}', space=vmem, size = 0x12000, scoped, tag = 'internal scratch']
  %s0 = inlined_call_operand.vmem [shape: f32[300,16], index: 0, kind: input, shape index: {}]
  %s1 = inlined_call_operand.vmem [shape: f32[16,64], index: 1, kind: input, shape index: {}]
  %s2 = inlined_call_operand.vmem [shape: f32[1,64], index: 2, kind: input, shape index: {}]
  %s3 = inlined_call_operand.vmem [shape: f32[64,64], index: 3, kind: input, shape index: {}]
  %s4 = inlined_call_operand.vmem [shape: f32[1,64], index: 4, kind: input, shape index: {}]
  %s5 = inlined_call_operand.vmem [shape: f32[64,8], index: 5, kind: input, shape index: {}]
  %s6 = inlined_call_operand.vmem [shape: f32[1,8], index: 6, kind: input, shape index: {}]
  %s7 = inlined_call_operand.vmem [shape: f32[300,8], index: 7, kind: output, shape index: {}]
  %s8 = sld [smem:[#allocation0]]
  $region61: #{tpu_custom_call.1} parent=0
    _
  %s10 = ssub.s32 1, %s8
  %s11 = scalar_select 0, %s10, %s8
  loop: start=0, step=1, limit=4
  $region2: #{tpu_custom_call.1} parent=0 // loop_pre_header
    _
  $region3: #{tpu_custom_call.1} parent=0 // loop_header
    %s13 = sphi 0, %s17
    %p14 = scmp.ge.s32.totalorder %s13, 4
    %s23 = sphi 0, %s25
    %s26 = sphi 0, %s23
    %s27 = sphi 0, %s26
    %s43 = sphi 0, %s27
    %s47 = sphi 0, %s47
    %s49 = sphi 0, %s47
    %s50 = sphi 0, %s49
    %s64 = sphi 0, %s50
    %s68 = sphi 0, %s68
    %s70 = sphi 0, %s68
    %s71 = sphi 0, %s70
    %s85 = sphi 0, %s71
    %s89 = sphi 0, %s89
    %s91 = sphi 0, %s89
    %s92 = sphi 0, %s91
    %s106 = sphi 0, %s92
    %s110 = sphi 0, %s110
    %s112 = sphi 0, %s110
    %s113 = sphi 0, %s112
    %s127 = sphi 0, %s113
    %s131 = sphi 0, %s131
    %s133 = sphi 0, %s131
    %s134 = sphi 0, %s133
    %s148 = sphi 0, %s134
    %s152 = sphi 0, %s152
    %s154 = sphi 0, %s152
    %s155 = sphi 0, %s154
    %s169 = sphi 0, %s155
    %s175 = sphi 0, %s177
    %s178 = sphi 0, %s175
    %s179 = sphi 0, %s178
    %s195 = sphi 0, %s179
  $region4: #{tpu_custom_call.1} parent=0 // loop_header_branch
    %16 = sbr.rel (%p14) target = $region8
  $region5: #{tpu_custom_call.1} parent=0 // loop_body
    %s18 = ssub.s32 %s13, 1
    %s19 = ssub.s32 %s13, 2
    %s20 = sadd.s32 %s13, 1
    %s21 = ssub.s32 %s13, %s20
    %p22 = scmp.eq.s32.totalorder %s21, 0
    %s24 = sadd.s32 %s23, 1
    %s25 = scalar_select %p22, %s23, %s24
    %p28 = pneg %p22
    %p29 = scmp.eq.s32.totalorder %s13, 1
    %p30 = por %p28, %p29
    %p31 = scmp.ne.s32.totalorder %s23, %s26
    %p32 = scmp.eq.s32.totalorder %s13, 0
    %p33 = por %p31, %p32
    %p34 = scmp.ne.s32.totalorder %s23, %s26
    %p35 = scmp.eq.s32.totalorder %s18, 1
    %p36 = por %p34, %p35
    %p37 = scmp.ne.s32.totalorder %s26, %s27
    %p38 = scmp.eq.s32.totalorder %s18, 0
    %p39 = por %p37, %p38
    %p40 = scmp.ne.s32.totalorder %s26, %s27
    %p41 = scmp.eq.s32.totalorder %s19, 1
    %p42 = por %p40, %p41
    %p44 = scmp.ne.s32.totalorder %s27, %s43
    %p45 = scmp.eq.s32.totalorder %s19, 0
    %p46 = por %p44, %p45
    %s48 = sadd.s32 %s47, 1
    %p51 = scmp.eq.s32.totalorder %s13, 1
    %p52 = scmp.ne.s32.totalorder %s47, %s49
    %p53 = scmp.eq.s32.totalorder %s13, 0
    %p54 = por %p52, %p53
    %p55 = scmp.ne.s32.totalorder %s47, %s49
    %p56 = scmp.eq.s32.totalorder %s18, 1
    %p57 = por %p55, %p56
    %p58 = scmp.ne.s32.totalorder %s49, %s50
    %p59 = scmp.eq.s32.totalorder %s18, 0
    %p60 = por %p58, %p59
    %p61 = scmp.ne.s32.totalorder %s49, %s50
    %p62 = scmp.eq.s32.totalorder %s19, 1
    %p63 = por %p61, %p62
    %p65 = scmp.ne.s32.totalorder %s50, %s64
    %p66 = scmp.eq.s32.totalorder %s19, 0
    %p67 = por %p65, %p66
    %s69 = sadd.s32 %s68, 1
    %p72 = scmp.eq.s32.totalorder %s13, 1
    %p73 = scmp.ne.s32.totalorder %s68, %s70
    %p74 = scmp.eq.s32.totalorder %s13, 0
    %p75 = por %p73, %p74
    %p76 = scmp.ne.s32.totalorder %s68, %s70
    %p77 = scmp.eq.s32.totalorder %s18, 1
    %p78 = por %p76, %p77
    %p79 = scmp.ne.s32.totalorder %s70, %s71
    %p80 = scmp.eq.s32.totalorder %s18, 0
    %p81 = por %p79, %p80
    %p82 = scmp.ne.s32.totalorder %s70, %s71
    %p83 = scmp.eq.s32.totalorder %s19, 1
    %p84 = por %p82, %p83
    %p86 = scmp.ne.s32.totalorder %s71, %s85
    %p87 = scmp.eq.s32.totalorder %s19, 0
    %p88 = por %p86, %p87
    %s90 = sadd.s32 %s89, 1
    %p93 = scmp.eq.s32.totalorder %s13, 1
    %p94 = scmp.ne.s32.totalorder %s89, %s91
    %p95 = scmp.eq.s32.totalorder %s13, 0
    %p96 = por %p94, %p95
    %p97 = scmp.ne.s32.totalorder %s89, %s91
    %p98 = scmp.eq.s32.totalorder %s18, 1
    %p99 = por %p97, %p98
    %p100 = scmp.ne.s32.totalorder %s91, %s92
    %p101 = scmp.eq.s32.totalorder %s18, 0
    %p102 = por %p100, %p101
    %p103 = scmp.ne.s32.totalorder %s91, %s92
    %p104 = scmp.eq.s32.totalorder %s19, 1
    %p105 = por %p103, %p104
    %p107 = scmp.ne.s32.totalorder %s92, %s106
    %p108 = scmp.eq.s32.totalorder %s19, 0
    %p109 = por %p107, %p108
    %s111 = sadd.s32 %s110, 1
    %p114 = scmp.eq.s32.totalorder %s13, 1
    %p115 = scmp.ne.s32.totalorder %s110, %s112
    %p116 = scmp.eq.s32.totalorder %s13, 0
    %p117 = por %p115, %p116
    %p118 = scmp.ne.s32.totalorder %s110, %s112
    %p119 = scmp.eq.s32.totalorder %s18, 1
    %p120 = por %p118, %p119
    %p121 = scmp.ne.s32.totalorder %s112, %s113
    %p122 = scmp.eq.s32.totalorder %s18, 0
    %p123 = por %p121, %p122
    %p124 = scmp.ne.s32.totalorder %s112, %s113
    %p125 = scmp.eq.s32.totalorder %s19, 1
    %p126 = por %p124, %p125
    %p128 = scmp.ne.s32.totalorder %s113, %s127
    %p129 = scmp.eq.s32.totalorder %s19, 0
    %p130 = por %p128, %p129
    %s132 = sadd.s32 %s131, 1
    %p135 = scmp.eq.s32.totalorder %s13, 1
    %p136 = scmp.ne.s32.totalorder %s131, %s133
    %p137 = scmp.eq.s32.totalorder %s13, 0
    %p138 = por %p136, %p137
    %p139 = scmp.ne.s32.totalorder %s131, %s133
    %p140 = scmp.eq.s32.totalorder %s18, 1
    %p141 = por %p139, %p140
    %p142 = scmp.ne.s32.totalorder %s133, %s134
    %p143 = scmp.eq.s32.totalorder %s18, 0
    %p144 = por %p142, %p143
    %p145 = scmp.ne.s32.totalorder %s133, %s134
    %p146 = scmp.eq.s32.totalorder %s19, 1
    %p147 = por %p145, %p146
    %p149 = scmp.ne.s32.totalorder %s134, %s148
    %p150 = scmp.eq.s32.totalorder %s19, 0
    %p151 = por %p149, %p150
    %s153 = sadd.s32 %s152, 1
    %p156 = scmp.eq.s32.totalorder %s13, 1
    %p157 = scmp.ne.s32.totalorder %s152, %s154
    %p158 = scmp.eq.s32.totalorder %s13, 0
    %p159 = por %p157, %p158
    %p160 = scmp.ne.s32.totalorder %s152, %s154
    %p161 = scmp.eq.s32.totalorder %s18, 1
    %p162 = por %p160, %p161
    %p163 = scmp.ne.s32.totalorder %s154, %s155
    %p164 = scmp.eq.s32.totalorder %s18, 0
    %p165 = por %p163, %p164
    %p166 = scmp.ne.s32.totalorder %s154, %s155
    %p167 = scmp.eq.s32.totalorder %s19, 1
    %p168 = por %p166, %p167
    %p170 = scmp.ne.s32.totalorder %s155, %s169
    %p171 = scmp.eq.s32.totalorder %s19, 0
    %p172 = por %p170, %p171
    %s173 = ssub.s32 %s13, %s20
    %p174 = scmp.eq.s32.totalorder %s173, 0
    %s176 = sadd.s32 %s175, 1
    %s177 = scalar_select %p174, %s175, %s176
    %p180 = pneg %p174
    %p181 = scmp.eq.s32.totalorder %s13, 1
    %p182 = por %p180, %p181
    %p183 = scmp.ne.s32.totalorder %s175, %s178
    %p184 = scmp.eq.s32.totalorder %s13, 0
    %p185 = por %p183, %p184
    %p186 = scmp.ne.s32.totalorder %s175, %s178
    %p187 = scmp.eq.s32.totalorder %s18, 1
    %p188 = por %p186, %p187
    %p189 = scmp.ne.s32.totalorder %s178, %s179
    %p190 = scmp.eq.s32.totalorder %s18, 0
    %p191 = por %p189, %p190
    %p192 = scmp.ne.s32.totalorder %s178, %s179
    %p193 = scmp.eq.s32.totalorder %s19, 1
    %p194 = por %p192, %p193
    %p196 = scmp.ne.s32.totalorder %s179, %s195
    %p197 = scmp.eq.s32.totalorder %s19, 0
    %p198 = por %p196, %p197
    %p199 = scmp.le.s32.totalorder 1, %s13
    %p200 = scmp.lt.s32.totalorder %s13, 3
    %p201 = pnand %p199, %p200
    %p202 = pneg %p201
    // Predicated region
    $region9: #{tpu_custom_call.1} parent=5 // pred_check
      _
    $region10: #{tpu_custom_call.1} parent=5 // pred_check_branch
      %204 = sbr.rel (%p201) target = $region12
    $region11: #{tpu_custom_call.1} parent=5 // pred_region
      %s205 = ssub.s32 %s13, 1
      // Predicated region
      $region13: #{tpu_custom_call.1} parent=11 // pred_check
        %p206 = pneg %p60
      $region14: #{tpu_custom_call.1} parent=11 // pred_check_branch
        %208 = sbr.rel (%p206) target = $region16
      $region15: #{tpu_custom_call.1} parent=11 // pred_region
        _
      $region16: #{tpu_custom_call.1} parent=11 // pred_fallthru
        _
      // Predicated region
      $region17: #{tpu_custom_call.1} parent=11 // pred_check
        %p209 = pneg %p81
      $region18: #{tpu_custom_call.1} parent=11 // pred_check_branch
        %211 = sbr.rel (%p209) target = $region20
      $region19: #{tpu_custom_call.1} parent=11 // pred_region
        _
      $region20: #{tpu_custom_call.1} parent=11 // pred_fallthru
        _
      // Predicated region
      $region21: #{tpu_custom_call.1} parent=11 // pred_check
        %p212 = pneg %p102
      $region22: #{tpu_custom_call.1} parent=11 // pred_check_branch
        %214 = sbr.rel (%p212) target = $region24
      $region23: #{tpu_custom_call.1} parent=11 // pred_region
        _
      $region24: #{tpu_custom_call.1} parent=11 // pred_fallthru
        _
      // Predicated region
      $region25: #{tpu_custom_call.1} parent=11 // pred_check
        %p215 = pneg %p123
      $region26: #{tpu_custom_call.1} parent=11 // pred_check_branch
        %217 = sbr.rel (%p215) target = $region28
      $region27: #{tpu_custom_call.1} parent=11 // pred_region
        _
      $region28: #{tpu_custom_call.1} parent=11 // pred_fallthru
        _
      // Predicated region
      $region29: #{tpu_custom_call.1} parent=11 // pred_check
        %p218 = pneg %p144
      $region30: #{tpu_custom_call.1} parent=11 // pred_check_branch
        %220 = sbr.rel (%p218) target = $region32
      $region31: #{tpu_custom_call.1} parent=11 // pred_region
        _
      $region32: #{tpu_custom_call.1} parent=11 // pred_fallthru
        _
      // Predicated region
      $region33: #{tpu_custom_call.1} parent=11 // pred_check
        %p221 = pneg %p165
      $region34: #{tpu_custom_call.1} parent=11 // pred_check_branch
        %223 = sbr.rel (%p221) target = $region36
      $region35: #{tpu_custom_call.1} parent=11 // pred_region
        _
      $region36: #{tpu_custom_call.1} parent=11 // pred_fallthru
        _
    $region12: #{tpu_custom_call.1} parent=5 // pred_fallthru
      _
    %p224 = scmp.lt.s32.totalorder %s13, 2
    // Predicated region
    $region37: #{tpu_custom_call.1} parent=5 // pred_check
      %p225 = pneg %p224
    $region38: #{tpu_custom_call.1} parent=5 // pred_check_branch
      %227 = sbr.rel (%p225) target = $region40
    $region39: #{tpu_custom_call.1} parent=5 // pred_region
      // Predicated region
      $region41: #{tpu_custom_call.1} parent=39 // pred_check
        %p228 = pneg %p33
      $region42: #{tpu_custom_call.1} parent=39 // pred_check_branch
        %230 = sbr.rel (%p228) target = $region44
      $region43: #{tpu_custom_call.1} parent=39 // pred_region
        %s231 = smul.u32 19, %s13
        %p232 = scmp.lt.s32.totalorder %s231, 37
        %s233 = scalar_select %p232, %s231, 37
        %s234 = smul.addr %s233, 8
        %s235 = scalar_lea.vmem %s0, %s234
        %s236 = smul.u32 19, %s13
      $region44: #{tpu_custom_call.1} parent=39 // pred_fallthru
        _
    $region40: #{tpu_custom_call.1} parent=5 // pred_fallthru
      _
    %p237 = scmp.le.s32.totalorder 1, %s13
    %p238 = scmp.lt.s32.totalorder %s13, 3
    %p239 = pnand %p237, %p238
    %p240 = pneg %p239
    // Predicated region
    $region45: #{tpu_custom_call.1} parent=5 // pred_check
      _
    $region46: #{tpu_custom_call.1} parent=5 // pred_check_branch
      %242 = sbr.rel (%p239) target = $region48
    $region47: #{tpu_custom_call.1} parent=5 // pred_region
      %s243 = ssub.s32 %s13, 1
      %s244 = smul.u32 19, %s18
      %p245 = scmp.lt.s32.totalorder %s244, 37
      %s246 = scalar_select %p245, %s244, 37
      %s247 = smul.addr %s246, 8
      %s248 = scalar_lea.vmem %s0, %s247
      %p249 = pneg %p39
      %p250 = pneg %p36
      %p251 = pneg %p60
      %p252 = pneg %p57
      %p253 = pneg %p81
      %p254 = pneg %p78
      %p255 = pneg %p102
      %p256 = pneg %p99
      %p257 = pneg %p123
      %p258 = pneg %p120
      %p259 = pneg %p144
      %p260 = pneg %p141
      %p261 = pneg %p165
      %p262 = pneg %p162
      %p263 = pneg %p191
      %p264 = pneg %p188
      %s265 = smul.u32 19, %s18
      %p266 = scmp.lt.s32.totalorder %s265, 37
      %s267 = scalar_select %p266, %s265, 37
      %s268 = smul.addr %s267, 8
      %s269 = scalar_lea.vmem %s7, %s268
      %s270 = smul.u32 19, %s18
      %p271 = scmp.lt.s32.totalorder %s270, 37
      %s272 = scalar_select %p271, %s270, 37
      %s273 = smul.addr %s272, 8
      %s274 = scalar_lea.vmem %s0, %s273
      %s275 = smul.u32 19, %s18
      %s276 = smul.u32 19, %s18
      %p277 = scmp.lt.s32.totalorder %s276, 37
      %s278 = scalar_select %p277, %s276, 37
      %s279 = smul.addr %s278, 8
      %s280 = scalar_lea.vmem %s7, %s279
      %s281 = smul.u32 19, %s18
      %v282 = vld [vmem:[%s274] sm:$0xff]
      %v283 = vld [vmem:[%s274 + $0x8] sm:$0xff]
      %v284 = vld [vmem:[%s274 + $0x10] sm:$0xff]
      %v285 = vld [vmem:[%s274 + $0x18] sm:$0xff]
      %v286 = vld [vmem:[%s274 + $0x20] sm:$0xff]
      %v287 = vld [vmem:[%s274 + $0x28] sm:$0xff]
      %v288 = vld [vmem:[%s274 + $0x30] sm:$0xff]
      %v289 = vld [vmem:[%s274 + $0x38] sm:$0xff]
      %v290 = vld [vmem:[%s274 + $0x40] sm:$0xff]
      %v291 = vld [vmem:[%s274 + $0x48] sm:$0xff]
      %v292 = vld [vmem:[%s274 + $0x50] sm:$0xff]
      %v293 = vld [vmem:[%s274 + $0x58] sm:$0xff]
      %v294 = vld [vmem:[%s274 + $0x60] sm:$0xff]
      %v295 = vld [vmem:[%s274 + $0x68] sm:$0xff]
      %v296 = vld [vmem:[%s274 + $0x70] sm:$0xff]
      %v297 = vld [vmem:[%s274 + $0x78] sm:$0xff]
      %v298 = vld [vmem:[%s274 + $0x80] sm:$0xff]
      %v299 = vld [vmem:[%s274 + $0x88] sm:$0xff]
      %v300 = vld [vmem:[%s274 + $0x90] sm:$0xff]
      %v301 = vld [vmem:[%s1] sm:$0xff]
      %v302 = vld [vmem:[%s1 + $0x8] sm:$0xff]
      %v303 = vld [vmem:[%s2] sm:$0x1]
      %v305 = vlaneseq
      %v306 = vshrl.u32 %v305, 7
      %v307 = vsub.s32 0, %v306
      %v308 = vrot.slane %v303, %v307
      %vm310 = vcmask 130048
      %v312 = vsel %vm310, %v282, 0
      %v315 = vsel %vm310, %v283, 0
      %v318 = vsel %vm310, %v284, 0
      %v321 = vsel %vm310, %v285, 0
      %v324 = vsel %vm310, %v286, 0
      %v327 = vsel %vm310, %v287, 0
      %v330 = vsel %vm310, %v288, 0
      %v333 = vsel %vm310, %v289, 0
      %v336 = vsel %vm310, %v290, 0
      %v339 = vsel %vm310, %v291, 0
      %v342 = vsel %vm310, %v292, 0
      %v345 = vsel %vm310, %v293, 0
      %v348 = vsel %vm310, %v294, 0
      %v351 = vsel %vm310, %v295, 0
      %v354 = vsel %vm310, %v296, 0
      %v357 = vsel %vm310, %v297, 0
      %v360 = vsel %vm310, %v298, 0
      %v363 = vsel %vm310, %v299, 0
      %v366 = vsel %vm310, %v300, 0
      %368 = vmatprep.subr.mxu0 0.0
      %369 = vmatpush1.msra.mxu0 %v301
      %370 = vmatprep.subr.mxu0 0.0
      %371 = vmatpush1.msra.mxu0 %v302
      %372 = vmatprep.subr.mxu0 0.0
      %373 = vmatpush1.msra.mxu0 0.0
      %374 = vmatprep.subr.mxu0 0.0
      %375 = vmatpush1.msra.mxu0 0.0
      %376 = vmatprep.subr.mxu0 0.0
      %377 = vmatpush1.msra.mxu0 0.0
      %378 = vmatprep.subr.mxu0 0.0
      %379 = vmatpush1.msra.mxu0 0.0
      %380 = vmatprep.subr.mxu0 0.0
      %381 = vmatpush1.msra.mxu0 0.0
      %382 = vmatprep.subr.mxu0 0.0
      %383 = vmatpush1.msra.mxu0 0.0
      %384 = vmatprep.subr.mxu0 0.0
      %385 = vmatpush1.msra.mxu0 0.0
      %386 = vmatprep.subr.mxu0 0.0
      %387 = vmatpush1.msra.mxu0 0.0
      %388 = vmatprep.subr.mxu0 0.0
      %389 = vmatpush1.msra.mxu0 0.0
      %390 = vmatprep.subr.mxu0 0.0
      %391 = vmatpush1.msra.mxu0 0.0
      %392 = vmatprep.subr.mxu0 0.0
      %393 = vmatpush1.msra.mxu0 0.0
      %394 = vmatprep.subr.mxu0 0.0
      %395 = vmatpush1.msra.mxu0 0.0
      %396 = vmatprep.subr.mxu0 0.0
      %397 = vmatpush1.msra.mxu0 0.0
      %398 = vmatprep.subr.mxu0 0.0
      %399 = vmatpush1.msra.mxu0 0.0
      %400 = vmatprep.subr.mxu0 0.0
      %401 = vmatpush1.msra.mxu0 0.0
      %402 = vmatprep.subr.mxu0 0.0
      %403 = vmatpush1.msra.mxu0 0.0
      %404 = vmatprep.subr.mxu0 0.0
      %405 = vmatpush1.msra.mxu0 0.0
      %406 = vmatprep.subr.mxu0 0.0
      %407 = vmatpush1.msra.mxu0 0.0
      %408 = vmatprep.subr.mxu0 0.0
      %409 = vmatpush1.msra.mxu0 0.0
      %410 = vmatprep.subr.mxu0 0.0
      %411 = vmatpush1.msra.mxu0 0.0
      %412 = vmatprep.subr.mxu0 0.0
      %413 = vmatpush1.msra.mxu0 0.0
      %414 = vmatprep.subr.mxu0 0.0
      %415 = vmatpush1.msra.mxu0 0.0
      %416 = vmatprep.subr.mxu0 0.0
      %417 = vmatpush1.msra.mxu0 0.0
      %418 = vmatprep.subr.mxu0 0.0
      %419 = vmatpush1.msra.mxu0 0.0
      %420 = vmatprep.subr.mxu0 0.0
      %421 = vmatpush1.msra.mxu0 0.0
      %422 = vmatprep.subr.mxu0 0.0
      %423 = vmatpush1.msra.mxu0 0.0
      %424 = vmatprep.subr.mxu0 0.0
      %425 = vmatpush1.msra.mxu0 0.0
      %426 = vmatprep.subr.mxu0 0.0
      %427 = vmatpush1.msra.mxu0 0.0
      %428 = vmatprep.subr.mxu0 0.0
      %429 = vmatpush1.msra.mxu0 0.0
      %430 = vmatprep.subr.mxu0 0.0
      %431 = vmatpush1.msra.mxu0 0.0
      %432 = vmatprep.mubr.f32.mxu0 0.0
      %433 = vmatmul.mubr.f32.gmra.mrb[0].mxu0 %v312
      %v434 = vpop.f32.mrb[0].mxu0
      %v435 = vadd.f32 %v308, %v434
      %v436 = vpop.f32.mrb[0].mxu0
      %437 = vmatprep.mubr.f32.mxu0 0.0
      %438 = vmatmul.mubr.f32.gmra.mrb[0].mxu0 %v315
      %v439 = vpop.f32.mrb[0].mxu0
      %v440 = vadd.f32 %v308, %v439
      %v441 = vpop.f32.mrb[0].mxu0
      %442 = vmatprep.mubr.f32.mxu0 0.0
      %443 = vmatmul.mubr.f32.gmra.mrb[0].mxu0 %v318
      %v444 = vpop.f32.mrb[0].mxu0
      %v445 = vadd.f32 %v308, %v444
      %v446 = vpop.f32.mrb[0].mxu0
      %447 = vmatprep.mubr.f32.mxu0 0.0
      %448 = vmatmul.mubr.f32.gmra.mrb[0].mxu0 %v321
      %v449 = vpop.f32.mrb[0].mxu0
      %v450 = vadd.f32 %v308, %v449
      %v451 = vpop.f32.mrb[0].mxu0
      %452 = vmatprep.mubr.f32.mxu0 0.0
      %453 = vmatmul.mubr.f32.gmra.mrb[0].mxu0 %v324
      %v454 = vpop.f32.mrb[0].mxu0
      %v455 = vadd.f32 %v308, %v454
      %v456 = vpop.f32.mrb[0].mxu0
      %457 = vmatprep.mubr.f32.mxu0 0.0
      %458 = vmatmul.mubr.f32.gmra.mrb[0].mxu0 %v327
      %v459 = vpop.f32.mrb[0].mxu0
      %v460 = vadd.f32 %v308, %v459
      %v461 = vpop.f32.mrb[0].mxu0
      %462 = vmatprep.mubr.f32.mxu0 0.0
      %463 = vmatmul.mubr.f32.gmra.mrb[0].mxu0 %v330
      %v464 = vpop.f32.mrb[0].mxu0
      %v465 = vadd.f32 %v308, %v464
      %v466 = vpop.f32.mrb[0].mxu0
      %467 = vmatprep.mubr.f32.mxu0 0.0
      %468 = vmatmul.mubr.f32.gmra.mrb[0].mxu0 %v333
      %v469 = vpop.f32.mrb[0].mxu0
      %v470 = vadd.f32 %v308, %v469
      %v471 = vpop.f32.mrb[0].mxu0
      %472 = vmatprep.mubr.f32.mxu0 0.0
      %473 = vmatmul.mubr.f32.gmra.mrb[0].mxu0 %v336
      %v474 = vpop.f32.mrb[0].mxu0
      %v475 = vadd.f32 %v308, %v474
      %v476 = vpop.f32.mrb[0].mxu0
      %477 = vmatprep.mubr.f32.mxu0 0.0
      %478 = vmatmul.mubr.f32.gmra.mrb[0].mxu0 %v339
      %v479 = vpop.f32.mrb[0].mxu0
      %v480 = vadd.f32 %v308, %v479
      %v481 = vpop.f32.mrb[0].mxu0
      %482 = vmatprep.mubr.f32.mxu0 0.0
      %483 = vmatmul.mubr.f32.gmra.mrb[0].mxu0 %v342
      %v484 = vpop.f32.mrb[0].mxu0
      %v485 = vadd.f32 %v308, %v484
      %v486 = vpop.f32.mrb[0].mxu0
      %487 = vmatprep.mubr.f32.mxu0 0.0
      %488 = vmatmul.mubr.f32.gmra.mrb[0].mxu0 %v345
      %v489 = vpop.f32.mrb[0].mxu0
      %v490 = vadd.f32 %v308, %v489
      %v491 = vpop.f32.mrb[0].mxu0
      %492 = vmatprep.mubr.f32.mxu0 0.0
      %493 = vmatmul.mubr.f32.gmra.mrb[0].mxu0 %v348
      %v494 = vpop.f32.mrb[0].mxu0
      %v495 = vadd.f32 %v308, %v494
      %v496 = vpop.f32.mrb[0].mxu0
      %497 = vmatprep.mubr.f32.mxu0 0.0
      %498 = vmatmul.mubr.f32.gmra.mrb[0].mxu0 %v351
      %v499 = vpop.f32.mrb[0].mxu0
      %v500 = vadd.f32 %v308, %v499
      %v501 = vpop.f32.mrb[0].mxu0
      %502 = vmatprep.mubr.f32.mxu0 0.0
      %503 = vmatmul.mubr.f32.gmra.mrb[0].mxu0 %v354
      %v504 = vpop.f32.mrb[0].mxu0
      %v505 = vadd.f32 %v308, %v504
      %v506 = vpop.f32.mrb[0].mxu0
      %507 = vmatprep.mubr.f32.mxu0 0.0
      %508 = vmatmul.mubr.f32.gmra.mrb[0].mxu0 %v357
      %v509 = vpop.f32.mrb[0].mxu0
      %v510 = vadd.f32 %v308, %v509
      %v511 = vpop.f32.mrb[0].mxu0
      %512 = vmatprep.mubr.f32.mxu0 0.0
      %513 = vmatmul.mubr.f32.gmra.mrb[0].mxu0 %v360
      %v514 = vpop.f32.mrb[0].mxu0
      %v515 = vadd.f32 %v308, %v514
      %v516 = vpop.f32.mrb[0].mxu0
      %517 = vmatprep.mubr.f32.mxu0 0.0
      %518 = vmatmul.mubr.f32.gmra.mrb[0].mxu0 %v363
      %v519 = vpop.f32.mrb[0].mxu0
      %v520 = vadd.f32 %v308, %v519
      %v521 = vpop.f32.mrb[0].mxu0
      %522 = vmatprep.mubr.f32.mxu0 0.0
      %523 = vmatmul.mubr.f32.gmra.mrb[0].mxu0 %v366
      %v524 = vpop.f32.mrb[0].mxu0
      %v525 = vadd.f32 %v308, %v524
      %v526 = vpop.f32.mrb[0].mxu0
      %527 = vdwg.mxu0
      %v528 = vmax.f32 %v435, 0.0
      %v529 = vmax.f32 %v440, 0.0
      %v530 = vmax.f32 %v445, 0.0
      %v531 = vmax.f32 %v450, 0.0
      %v532 = vmax.f32 %v455, 0.0
      %v533 = vmax.f32 %v460, 0.0
      %v534 = vmax.f32 %v465, 0.0
      %v535 = vmax.f32 %v470, 0.0
      %v536 = vmax.f32 %v475, 0.0
      %v537 = vmax.f32 %v480, 0.0
      %v538 = vmax.f32 %v485, 0.0
      %v539 = vmax.f32 %v490, 0.0
      %v540 = vmax.f32 %v495, 0.0
      %v541 = vmax.f32 %v500, 0.0
      %v542 = vmax.f32 %v505, 0.0
      %v543 = vmax.f32 %v510, 0.0
      %v544 = vmax.f32 %v515, 0.0
      %v545 = vmax.f32 %v520, 0.0
      %v546 = vmax.f32 %v525, 0.0
      %v547 = vld [vmem:[%s3] sm:$0xff]
      %v548 = vld [vmem:[%s3 + $0x8] sm:$0xff]
      %v549 = vld [vmem:[%s3 + $0x10] sm:$0xff]
      %v550 = vld [vmem:[%s3 + $0x18] sm:$0xff]
      %v551 = vld [vmem:[%s3 + $0x20] sm:$0xff]
      %v552 = vld [vmem:[%s3 + $0x28] sm:$0xff]
      %v553 = vld [vmem:[%s3 + $0x30] sm:$0xff]
      %v554 = vld [vmem:[%s3 + $0x38] sm:$0xff]
      %v555 = vld [vmem:[%s4] sm:$0x1]
      %v557 = vlaneseq
      %v558 = vshrl.u32 %v557, 7
      %v559 = vsub.s32 0, %v558
      %v560 = vrot.slane %v555, %v559
      %vm562 = vcmask 523264
      %v564 = vsel %vm562, %v528, 0
      %v567 = vsel %vm562, %v529, 0
      %v570 = vsel %vm562, %v530, 0
      %v573 = vsel %vm562, %v531, 0
      %v576 = vsel %vm562, %v532, 0
      %v579 = vsel %vm562, %v533, 0
      %v582 = vsel %vm562, %v534, 0
      %v585 = vsel %vm562, %v535, 0
      %v588 = vsel %vm562, %v536, 0
      %v591 = vsel %vm562, %v537, 0
      %v594 = vsel %vm562, %v538, 0
      %v597 = vsel %vm562, %v539, 0
      %v600 = vsel %vm562, %v540, 0
      %v603 = vsel %vm562, %v541, 0
      %v606 = vsel %vm562, %v542, 0
      %v609 = vsel %vm562, %v543, 0
      %v612 = vsel %vm562, %v544, 0
      %v615 = vsel %vm562, %v545, 0
      %v618 = vsel %vm562, %v546, 0
      %620 = vmatprep.subr.mxu0 0.0
      %621 = vmatpush1.msra.mxu0 %v547
      %622 = vmatprep.subr.mxu0 0.0
      %623 = vmatpush1.msra.mxu0 %v548
      %624 = vmatprep.subr.mxu0 0.0
      %625 = vmatpush1.msra.mxu0 %v549
      %626 = vmatprep.subr.mxu0 0.0
      %627 = vmatpush1.msra.mxu0 %v550
      %628 = vmatprep.subr.mxu0 0.0
      %629 = vmatpush1.msra.mxu0 %v551
      %630 = vmatprep.subr.mxu0 0.0
      %631 = vmatpush1.msra.mxu0 %v552
      %632 = vmatprep.subr.mxu0 0.0
      %633 = vmatpush1.msra.mxu0 %v553
      %634 = vmatprep.subr.mxu0 0.0
      %635 = vmatpush1.msra.mxu0 %v554
      %636 = vmatprep.subr.mxu0 0.0
      %637 = vmatpush1.msra.mxu0 0.0
      %638 = vmatprep.subr.mxu0 0.0
      %639 = vmatpush1.msra.mxu0 0.0
      %640 = vmatprep.subr.mxu0 0.0
      %641 = vmatpush1.msra.mxu0 0.0
      %642 = vmatprep.subr.mxu0 0.0
      %643 = vmatpush1.msra.mxu0 0.0
      %644 = vmatprep.subr.mxu0 0.0
      %645 = vmatpush1.msra.mxu0 0.0
      %646 = vmatprep.subr.mxu0 0.0
      %647 = vmatpush1.msra.mxu0 0.0
      %648 = vmatprep.subr.mxu0 0.0
      %649 = vmatpush1.msra.mxu0 0.0
      %650 = vmatprep.subr.mxu0 0.0
      %651 = vmatpush1.msra.mxu0 0.0
      %652 = vmatprep.subr.mxu0 0.0
      %653 = vmatpush1.msra.mxu0 0.0
      %654 = vmatprep.subr.mxu0 0.0
      %655 = vmatpush1.msra.mxu0 0.0
      %656 = vmatprep.subr.mxu0 0.0
      %657 = vmatpush1.msra.mxu0 0.0
      %658 = vmatprep.subr.mxu0 0.0
      %659 = vmatpush1.msra.mxu0 0.0
      %660 = vmatprep.subr.mxu0 0.0
      %661 = vmatpush1.msra.mxu0 0.0
      %662 = vmatprep.subr.mxu0 0.0
      %663 = vmatpush1.msra.mxu0 0.0
      %664 = vmatprep.subr.mxu0 0.0
      %665 = vmatpush1.msra.mxu0 0.0
      %666 = vmatprep.subr.mxu0 0.0
      %667 = vmatpush1.msra.mxu0 0.0
      %668 = vmatprep.subr.mxu0 0.0
      %669 = vmatpush1.msra.mxu0 0.0
      %670 = vmatprep.subr.mxu0 0.0
      %671 = vmatpush1.msra.mxu0 0.0
      %672 = vmatprep.subr.mxu0 0.0
      %673 = vmatpush1.msra.mxu0 0.0
      %674 = vmatprep.subr.mxu0 0.0
      %675 = vmatpush1.msra.mxu0 0.0
      %676 = vmatprep.subr.mxu0 0.0
      %677 = vmatpush1.msra.mxu0 0.0
      %678 = vmatprep.subr.mxu0 0.0
      %679 = vmatpush1.msra.mxu0 0.0
      %680 = vmatprep.subr.mxu0 0.0
      %681 = vmatpush1.msra.mxu0 0.0
      %682 = vmatprep.subr.mxu0 0.0
      %683 = vmatpush1.msra.mxu0 0.0
      %684 = vmatprep.mubr.f32.mxu0 0.0
      %685 = vmatmul.mubr.f32.gmra.mrb[0].mxu0 %v564
      %v686 = vpop.f32.mrb[0].mxu0
      %v687 = vadd.f32 %v560, %v686
      %v688 = vpop.f32.mrb[0].mxu0
      %689 = vmatprep.mubr.f32.mxu0 0.0
      %690 = vmatmul.mubr.f32.gmra.mrb[0].mxu0 %v567
      %v691 = vpop.f32.mrb[0].mxu0
      %v692 = vadd.f32 %v560, %v691
      %v693 = vpop.f32.mrb[0].mxu0
      %694 = vmatprep.mubr.f32.mxu0 0.0
      %695 = vmatmul.mubr.f32.gmra.mrb[0].mxu0 %v570
      %v696 = vpop.f32.mrb[0].mxu0
      %v697 = vadd.f32 %v560, %v696
      %v698 = vpop.f32.mrb[0].mxu0
      %699 = vmatprep.mubr.f32.mxu0 0.0
      %700 = vmatmul.mubr.f32.gmra.mrb[0].mxu0 %v573
      %v701 = vpop.f32.mrb[0].mxu0
      %v702 = vadd.f32 %v560, %v701
      %v703 = vpop.f32.mrb[0].mxu0
      %704 = vmatprep.mubr.f32.mxu0 0.0
      %705 = vmatmul.mubr.f32.gmra.mrb[0].mxu0 %v576
      %v706 = vpop.f32.mrb[0].mxu0
      %v707 = vadd.f32 %v560, %v706
      %v708 = vpop.f32.mrb[0].mxu0
      %709 = vmatprep.mubr.f32.mxu0 0.0
      %710 = vmatmul.mubr.f32.gmra.mrb[0].mxu0 %v579
      %v711 = vpop.f32.mrb[0].mxu0
      %v712 = vadd.f32 %v560, %v711
      %v713 = vpop.f32.mrb[0].mxu0
      %714 = vmatprep.mubr.f32.mxu0 0.0
      %715 = vmatmul.mubr.f32.gmra.mrb[0].mxu0 %v582
      %v716 = vpop.f32.mrb[0].mxu0
      %v717 = vadd.f32 %v560, %v716
      %v718 = vpop.f32.mrb[0].mxu0
      %719 = vmatprep.mubr.f32.mxu0 0.0
      %720 = vmatmul.mubr.f32.gmra.mrb[0].mxu0 %v585
      %v721 = vpop.f32.mrb[0].mxu0
      %v722 = vadd.f32 %v560, %v721
      %v723 = vpop.f32.mrb[0].mxu0
      %724 = vmatprep.mubr.f32.mxu0 0.0
      %725 = vmatmul.mubr.f32.gmra.mrb[0].mxu0 %v588
      %v726 = vpop.f32.mrb[0].mxu0
      %v727 = vadd.f32 %v560, %v726
      %v728 = vpop.f32.mrb[0].mxu0
      %729 = vmatprep.mubr.f32.mxu0 0.0
      %730 = vmatmul.mubr.f32.gmra.mrb[0].mxu0 %v591
      %v731 = vpop.f32.mrb[0].mxu0
      %v732 = vadd.f32 %v560, %v731
      %v733 = vpop.f32.mrb[0].mxu0
      %734 = vmatprep.mubr.f32.mxu0 0.0
      %735 = vmatmul.mubr.f32.gmra.mrb[0].mxu0 %v594
      %v736 = vpop.f32.mrb[0].mxu0
      %v737 = vadd.f32 %v560, %v736
      %v738 = vpop.f32.mrb[0].mxu0
      %739 = vmatprep.mubr.f32.mxu0 0.0
      %740 = vmatmul.mubr.f32.gmra.mrb[0].mxu0 %v597
      %v741 = vpop.f32.mrb[0].mxu0
      %v742 = vadd.f32 %v560, %v741
      %v743 = vpop.f32.mrb[0].mxu0
      %744 = vmatprep.mubr.f32.mxu0 0.0
      %745 = vmatmul.mubr.f32.gmra.mrb[0].mxu0 %v600
      %v746 = vpop.f32.mrb[0].mxu0
      %v747 = vadd.f32 %v560, %v746
      %v748 = vpop.f32.mrb[0].mxu0
      %749 = vmatprep.mubr.f32.mxu0 0.0
      %750 = vmatmul.mubr.f32.gmra.mrb[0].mxu0 %v603
      %v751 = vpop.f32.mrb[0].mxu0
      %v752 = vadd.f32 %v560, %v751
      %v753 = vpop.f32.mrb[0].mxu0
      %754 = vmatprep.mubr.f32.mxu0 0.0
      %755 = vmatmul.mubr.f32.gmra.mrb[0].mxu0 %v606
      %v756 = vpop.f32.mrb[0].mxu0
      %v757 = vadd.f32 %v560, %v756
      %v758 = vpop.f32.mrb[0].mxu0
      %759 = vmatprep.mubr.f32.mxu0 0.0
      %760 = vmatmul.mubr.f32.gmra.mrb[0].mxu0 %v609
      %v761 = vpop.f32.mrb[0].mxu0
      %v762 = vadd.f32 %v560, %v761
      %v763 = vpop.f32.mrb[0].mxu0
      %764 = vmatprep.mubr.f32.mxu0 0.0
      %765 = vmatmul.mubr.f32.gmra.mrb[0].mxu0 %v612
      %v766 = vpop.f32.mrb[0].mxu0
      %v767 = vadd.f32 %v560, %v766
      %v768 = vpop.f32.mrb[0].mxu0
      %769 = vmatprep.mubr.f32.mxu0 0.0
      %770 = vmatmul.mubr.f32.gmra.mrb[0].mxu0 %v615
      %v771 = vpop.f32.mrb[0].mxu0
      %v772 = vadd.f32 %v560, %v771
      %v773 = vpop.f32.mrb[0].mxu0
      %774 = vmatprep.mubr.f32.mxu0 0.0
      %775 = vmatmul.mubr.f32.gmra.mrb[0].mxu0 %v618
      %v776 = vpop.f32.mrb[0].mxu0
      %v777 = vadd.f32 %v560, %v776
      %v778 = vpop.f32.mrb[0].mxu0
      %779 = vdwg.mxu0
      %v780 = vmax.f32 %v687, 0.0
      %v781 = vmax.f32 %v692, 0.0
      %v782 = vmax.f32 %v697, 0.0
      %v783 = vmax.f32 %v702, 0.0
      %v784 = vmax.f32 %v707, 0.0
      %v785 = vmax.f32 %v712, 0.0
      %v786 = vmax.f32 %v717, 0.0
      %v787 = vmax.f32 %v722, 0.0
      %v788 = vmax.f32 %v727, 0.0
      %v789 = vmax.f32 %v732, 0.0
      %v790 = vmax.f32 %v737, 0.0
      %v791 = vmax.f32 %v742, 0.0
      %v792 = vmax.f32 %v747, 0.0
      %v793 = vmax.f32 %v752, 0.0
      %v794 = vmax.f32 %v757, 0.0
      %v795 = vmax.f32 %v762, 0.0
      %v796 = vmax.f32 %v767, 0.0
      %v797 = vmax.f32 %v772, 0.0
      %v798 = vmax.f32 %v777, 0.0
      %v799 = vld [vmem:[%s5] sm:$0xff]
      %v800 = vld [vmem:[%s5 + $0x8] sm:$0xff]
      %v801 = vld [vmem:[%s5 + $0x10] sm:$0xff]
      %v802 = vld [vmem:[%s5 + $0x18] sm:$0xff]
      %v803 = vld [vmem:[%s5 + $0x20] sm:$0xff]
      %v804 = vld [vmem:[%s5 + $0x28] sm:$0xff]
      %v805 = vld [vmem:[%s5 + $0x30] sm:$0xff]
      %v806 = vld [vmem:[%s5 + $0x38] sm:$0xff]
      %v807 = vld [vmem:[%s6] sm:$0x1]
      %v809 = vlaneseq
      %v810 = vshrl.u32 %v809, 7
      %v811 = vsub.s32 0, %v810
      %v812 = vrot.slane %v807, %v811
      %v815 = vsel %vm562, %v780, 0
      %v818 = vsel %vm562, %v781, 0
      %v821 = vsel %vm562, %v782, 0
      %v824 = vsel %vm562, %v783, 0
      %v827 = vsel %vm562, %v784, 0
      %v830 = vsel %vm562, %v785, 0
      %v833 = vsel %vm562, %v786, 0
      %v836 = vsel %vm562, %v787, 0
      %v839 = vsel %vm562, %v788, 0
      %v842 = vsel %vm562, %v789, 0
      %v845 = vsel %vm562, %v790, 0
      %v848 = vsel %vm562, %v791, 0
      %v851 = vsel %vm562, %v792, 0
      %v854 = vsel %vm562, %v793, 0
      %v857 = vsel %vm562, %v794, 0
      %v860 = vsel %vm562, %v795, 0
      %v863 = vsel %vm562, %v796, 0
      %v866 = vsel %vm562, %v797, 0
      %v869 = vsel %vm562, %v798, 0
      %871 = vmatprep.subr.mxu0 0.0
      %872 = vmatpush1.msra.mxu0 %v799
      %873 = vmatprep.subr.mxu0 0.0
      %874 = vmatpush1.msra.mxu0 %v800
      %875 = vmatprep.subr.mxu0 0.0
      %876 = vmatpush1.msra.mxu0 %v801
      %877 = vmatprep.subr.mxu0 0.0
      %878 = vmatpush1.msra.mxu0 %v802
      %879 = vmatprep.subr.mxu0 0.0
      %880 = vmatpush1.msra.mxu0 %v803
      %881 = vmatprep.subr.mxu0 0.0
      %882 = vmatpush1.msra.mxu0 %v804
      %883 = vmatprep.subr.mxu0 0.0
      %884 = vmatpush1.msra.mxu0 %v805
      %885 = vmatprep.subr.mxu0 0.0
      %886 = vmatpush1.msra.mxu0 %v806
      %887 = vmatprep.subr.mxu0 0.0
      %888 = vmatpush1.msra.mxu0 0.0
      %889 = vmatprep.subr.mxu0 0.0
      %890 = vmatpush1.msra.mxu0 0.0
      %891 = vmatprep.subr.mxu0 0.0
      %892 = vmatpush1.msra.mxu0 0.0
      %893 = vmatprep.subr.mxu0 0.0
      %894 = vmatpush1.msra.mxu0 0.0
      %895 = vmatprep.subr.mxu0 0.0
      %896 = vmatpush1.msra.mxu0 0.0
      %897 = vmatprep.subr.mxu0 0.0
      %898 = vmatpush1.msra.mxu0 0.0
      %899 = vmatprep.subr.mxu0 0.0
      %900 = vmatpush1.msra.mxu0 0.0
      %901 = vmatprep.subr.mxu0 0.0
      %902 = vmatpush1.msra.mxu0 0.0
      %903 = vmatprep.subr.mxu0 0.0
      %904 = vmatpush1.msra.mxu0 0.0
      %905 = vmatprep.subr.mxu0 0.0
      %906 = vmatpush1.msra.mxu0 0.0
      %907 = vmatprep.subr.mxu0 0.0
      %908 = vmatpush1.msra.mxu0 0.0
      %909 = vmatprep.subr.mxu0 0.0
      %910 = vmatpush1.msra.mxu0 0.0
      %911 = vmatprep.subr.mxu0 0.0
      %912 = vmatpush1.msra.mxu0 0.0
      %913 = vmatprep.subr.mxu0 0.0
      %914 = vmatpush1.msra.mxu0 0.0
      %915 = vmatprep.subr.mxu0 0.0
      %916 = vmatpush1.msra.mxu0 0.0
      %917 = vmatprep.subr.mxu0 0.0
      %918 = vmatpush1.msra.mxu0 0.0
      %919 = vmatprep.subr.mxu0 0.0
      %920 = vmatpush1.msra.mxu0 0.0
      %921 = vmatprep.subr.mxu0 0.0
      %922 = vmatpush1.msra.mxu0 0.0
      %923 = vmatprep.subr.mxu0 0.0
      %924 = vmatpush1.msra.mxu0 0.0
      %925 = vmatprep.subr.mxu0 0.0
      %926 = vmatpush1.msra.mxu0 0.0
      %927 = vmatprep.subr.mxu0 0.0
      %928 = vmatpush1.msra.mxu0 0.0
      %929 = vmatprep.subr.mxu0 0.0
      %930 = vmatpush1.msra.mxu0 0.0
      %931 = vmatprep.subr.mxu0 0.0
      %932 = vmatpush1.msra.mxu0 0.0
      %933 = vmatprep.subr.mxu0 0.0
      %934 = vmatpush1.msra.mxu0 0.0
      %935 = vmatprep.mubr.f32.mxu0 0.0
      %936 = vmatmul.mubr.f32.gmra.mrb[0].mxu0 %v815
      %v937 = vpop.f32.mrb[0].mxu0
      %v938 = vadd.f32 %v812, %v937
      %v939 = vpop.f32.mrb[0].mxu0
      %940 = vmatprep.mubr.f32.mxu0 0.0
      %941 = vmatmul.mubr.f32.gmra.mrb[0].mxu0 %v818
      %v942 = vpop.f32.mrb[0].mxu0
      %v943 = vadd.f32 %v812, %v942
      %v944 = vpop.f32.mrb[0].mxu0
      %945 = vmatprep.mubr.f32.mxu0 0.0
      %946 = vmatmul.mubr.f32.gmra.mrb[0].mxu0 %v821
      %v947 = vpop.f32.mrb[0].mxu0
      %v948 = vadd.f32 %v812, %v947
      %v949 = vpop.f32.mrb[0].mxu0
      %950 = vmatprep.mubr.f32.mxu0 0.0
      %951 = vmatmul.mubr.f32.gmra.mrb[0].mxu0 %v824
      %v952 = vpop.f32.mrb[0].mxu0
      %v953 = vadd.f32 %v812, %v952
      %v954 = vpop.f32.mrb[0].mxu0
      %955 = vmatprep.mubr.f32.mxu0 0.0
      %956 = vmatmul.mubr.f32.gmra.mrb[0].mxu0 %v827
      %v957 = vpop.f32.mrb[0].mxu0
      %v958 = vadd.f32 %v812, %v957
      %v959 = vpop.f32.mrb[0].mxu0
      %960 = vmatprep.mubr.f32.mxu0 0.0
      %961 = vmatmul.mubr.f32.gmra.mrb[0].mxu0 %v830
      %v962 = vpop.f32.mrb[0].mxu0
      %v963 = vadd.f32 %v812, %v962
      %v964 = vpop.f32.mrb[0].mxu0
      %965 = vmatprep.mubr.f32.mxu0 0.0
      %966 = vmatmul.mubr.f32.gmra.mrb[0].mxu0 %v833
      %v967 = vpop.f32.mrb[0].mxu0
      %v968 = vadd.f32 %v812, %v967
      %v969 = vpop.f32.mrb[0].mxu0
      %970 = vmatprep.mubr.f32.mxu0 0.0
      %971 = vmatmul.mubr.f32.gmra.mrb[0].mxu0 %v836
      %v972 = vpop.f32.mrb[0].mxu0
      %v973 = vadd.f32 %v812, %v972
      %v974 = vpop.f32.mrb[0].mxu0
      %975 = vmatprep.mubr.f32.mxu0 0.0
      %976 = vmatmul.mubr.f32.gmra.mrb[0].mxu0 %v839
      %v977 = vpop.f32.mrb[0].mxu0
      %v978 = vadd.f32 %v812, %v977
      %v979 = vpop.f32.mrb[0].mxu0
      %980 = vmatprep.mubr.f32.mxu0 0.0
      %981 = vmatmul.mubr.f32.gmra.mrb[0].mxu0 %v842
      %v982 = vpop.f32.mrb[0].mxu0
      %v983 = vadd.f32 %v812, %v982
      %v984 = vpop.f32.mrb[0].mxu0
      %985 = vmatprep.mubr.f32.mxu0 0.0
      %986 = vmatmul.mubr.f32.gmra.mrb[0].mxu0 %v845
      %v987 = vpop.f32.mrb[0].mxu0
      %v988 = vadd.f32 %v812, %v987
      %v989 = vpop.f32.mrb[0].mxu0
      %990 = vmatprep.mubr.f32.mxu0 0.0
      %991 = vmatmul.mubr.f32.gmra.mrb[0].mxu0 %v848
      %v992 = vpop.f32.mrb[0].mxu0
      %v993 = vadd.f32 %v812, %v992
      %v994 = vpop.f32.mrb[0].mxu0
      %995 = vmatprep.mubr.f32.mxu0 0.0
      %996 = vmatmul.mubr.f32.gmra.mrb[0].mxu0 %v851
      %v997 = vpop.f32.mrb[0].mxu0
      %v998 = vadd.f32 %v812, %v997
      %v999 = vpop.f32.mrb[0].mxu0
      %1000 = vmatprep.mubr.f32.mxu0 0.0
      %1001 = vmatmul.mubr.f32.gmra.mrb[0].mxu0 %v854
      %v1002 = vpop.f32.mrb[0].mxu0
      %v1003 = vadd.f32 %v812, %v1002
      %v1004 = vpop.f32.mrb[0].mxu0
      %1005 = vmatprep.mubr.f32.mxu0 0.0
      %1006 = vmatmul.mubr.f32.gmra.mrb[0].mxu0 %v857
      %v1007 = vpop.f32.mrb[0].mxu0
      %v1008 = vadd.f32 %v812, %v1007
      %v1009 = vpop.f32.mrb[0].mxu0
      %1010 = vmatprep.mubr.f32.mxu0 0.0
      %1011 = vmatmul.mubr.f32.gmra.mrb[0].mxu0 %v860
      %v1012 = vpop.f32.mrb[0].mxu0
      %v1013 = vadd.f32 %v812, %v1012
      %v1014 = vpop.f32.mrb[0].mxu0
      %1015 = vmatprep.mubr.f32.mxu0 0.0
      %1016 = vmatmul.mubr.f32.gmra.mrb[0].mxu0 %v863
      %v1017 = vpop.f32.mrb[0].mxu0
      %v1018 = vadd.f32 %v812, %v1017
      %v1019 = vpop.f32.mrb[0].mxu0
      %1020 = vmatprep.mubr.f32.mxu0 0.0
      %1021 = vmatmul.mubr.f32.gmra.mrb[0].mxu0 %v866
      %v1022 = vpop.f32.mrb[0].mxu0
      %v1023 = vadd.f32 %v812, %v1022
      %v1024 = vpop.f32.mrb[0].mxu0
      %1025 = vmatprep.mubr.f32.mxu0 0.0
      %1026 = vmatmul.mubr.f32.gmra.mrb[0].mxu0 %v869
      %v1027 = vpop.f32.mrb[0].mxu0
      %v1028 = vadd.f32 %v812, %v1027
      %v1029 = vpop.f32.mrb[0].mxu0
      %1030 = vdwg.mxu0
      %v1031 = vxor.u32 %v938, 2147483648
      %v1032 = vxor.u32 %v943, 2147483648
      %v1033 = vxor.u32 %v948, 2147483648
      %v1034 = vxor.u32 %v953, 2147483648
      %v1035 = vxor.u32 %v958, 2147483648
      %v1036 = vxor.u32 %v963, 2147483648
      %v1037 = vxor.u32 %v968, 2147483648
      %v1038 = vxor.u32 %v973, 2147483648
      %v1039 = vxor.u32 %v978, 2147483648
      %v1040 = vxor.u32 %v983, 2147483648
      %v1041 = vxor.u32 %v988, 2147483648
      %v1042 = vxor.u32 %v993, 2147483648
      %v1043 = vxor.u32 %v998, 2147483648
      %v1044 = vxor.u32 %v1003, 2147483648
      %v1045 = vxor.u32 %v1008, 2147483648
      %v1046 = vxor.u32 %v1013, 2147483648
      %v1047 = vxor.u32 %v1018, 2147483648
      %v1048 = vxor.u32 %v1023, 2147483648
      %v1049 = vxor.u32 %v1028, 2147483648
      %v1050 = vmul.f32 %v1031, 1.442695
      %v1051 = vpow.pop %v1050
      %v1052 = vmul.f32 %v1032, 1.442695
      %v1053 = vpow.pop %v1052
      %v1054 = vmul.f32 %v1033, 1.442695
      %v1055 = vpow.pop %v1054
      %v1056 = vmul.f32 %v1034, 1.442695
      %v1057 = vpow.pop %v1056
      %v1058 = vmul.f32 %v1035, 1.442695
      %v1059 = vpow.pop %v1058
      %v1060 = vmul.f32 %v1036, 1.442695
      %v1061 = vpow.pop %v1060
      %v1062 = vmul.f32 %v1037, 1.442695
      %v1063 = vpow.pop %v1062
      %v1064 = vmul.f32 %v1038, 1.442695
      %v1065 = vpow.pop %v1064
      %v1066 = vmul.f32 %v1039, 1.442695
      %v1067 = vpow.pop %v1066
      %v1068 = vmul.f32 %v1040, 1.442695
      %v1069 = vpow.pop %v1068
      %v1070 = vmul.f32 %v1041, 1.442695
      %v1071 = vpow.pop %v1070
      %v1072 = vmul.f32 %v1042, 1.442695
      %v1073 = vpow.pop %v1072
      %v1074 = vmul.f32 %v1043, 1.442695
      %v1075 = vpow.pop %v1074
      %v1076 = vmul.f32 %v1044, 1.442695
      %v1077 = vpow.pop %v1076
      %v1078 = vmul.f32 %v1045, 1.442695
      %v1079 = vpow.pop %v1078
      %v1080 = vmul.f32 %v1046, 1.442695
      %v1081 = vpow.pop %v1080
      %v1082 = vmul.f32 %v1047, 1.442695
      %v1083 = vpow.pop %v1082
      %v1084 = vmul.f32 %v1048, 1.442695
      %v1085 = vpow.pop %v1084
      %v1086 = vmul.f32 %v1049, 1.442695
      %v1087 = vpow.pop %v1086
      %v1088 = vadd.f32 %v1051, 1.0
      %v1089 = vadd.f32 %v1053, 1.0
      %v1090 = vadd.f32 %v1055, 1.0
      %v1091 = vadd.f32 %v1057, 1.0
      %v1092 = vadd.f32 %v1059, 1.0
      %v1093 = vadd.f32 %v1061, 1.0
      %v1094 = vadd.f32 %v1063, 1.0
      %v1095 = vadd.f32 %v1065, 1.0
      %v1096 = vadd.f32 %v1067, 1.0
      %v1097 = vadd.f32 %v1069, 1.0
      %v1098 = vadd.f32 %v1071, 1.0
      %v1099 = vadd.f32 %v1073, 1.0
      %v1100 = vadd.f32 %v1075, 1.0
      %v1101 = vadd.f32 %v1077, 1.0
      %v1102 = vadd.f32 %v1079, 1.0
      %v1103 = vadd.f32 %v1081, 1.0
      %v1104 = vadd.f32 %v1083, 1.0
      %v1105 = vadd.f32 %v1085, 1.0
      %v1106 = vadd.f32 %v1087, 1.0
      %v1107 = vrcp.pop %v1088
      %v1108 = vmul.f32 1.0, %v1107
      %v1109 = vrcp.pop %v1089
      %v1110 = vmul.f32 1.0, %v1109
      %v1111 = vrcp.pop %v1090
      %v1112 = vmul.f32 1.0, %v1111
      %v1113 = vrcp.pop %v1091
      %v1114 = vmul.f32 1.0, %v1113
      %v1115 = vrcp.pop %v1092
      %v1116 = vmul.f32 1.0, %v1115
      %v1117 = vrcp.pop %v1093
      %v1118 = vmul.f32 1.0, %v1117
      %v1119 = vrcp.pop %v1094
      %v1120 = vmul.f32 1.0, %v1119
      %v1121 = vrcp.pop %v1095
      %v1122 = vmul.f32 1.0, %v1121
      %v1123 = vrcp.pop %v1096
      %v1124 = vmul.f32 1.0, %v1123
      %v1125 = vrcp.pop %v1097
      %v1126 = vmul.f32 1.0, %v1125
      %v1127 = vrcp.pop %v1098
      %v1128 = vmul.f32 1.0, %v1127
      %v1129 = vrcp.pop %v1099
      %v1130 = vmul.f32 1.0, %v1129
      %v1131 = vrcp.pop %v1100
      %v1132 = vmul.f32 1.0, %v1131
      %v1133 = vrcp.pop %v1101
      %v1134 = vmul.f32 1.0, %v1133
      %v1135 = vrcp.pop %v1102
      %v1136 = vmul.f32 1.0, %v1135
      %v1137 = vrcp.pop %v1103
      %v1138 = vmul.f32 1.0, %v1137
      %v1139 = vrcp.pop %v1104
      %v1140 = vmul.f32 1.0, %v1139
      %v1141 = vrcp.pop %v1105
      %v1142 = vmul.f32 1.0, %v1141
      %v1143 = vrcp.pop %v1106
      %v1144 = vmul.f32 1.0, %v1143
      %vm1145 = vcmask 64512
      %1146 = vst.msk [vmem:[%s280] sm:$0xff] %vm1145, %v1108
      %1147 = vst.msk [vmem:[%s280 + $0x8] sm:$0xff] %vm1145, %v1110
      %1148 = vst.msk [vmem:[%s280 + $0x10] sm:$0xff] %vm1145, %v1112
      %1149 = vst.msk [vmem:[%s280 + $0x18] sm:$0xff] %vm1145, %v1114
      %1150 = vst.msk [vmem:[%s280 + $0x20] sm:$0xff] %vm1145, %v1116
      %1151 = vst.msk [vmem:[%s280 + $0x28] sm:$0xff] %vm1145, %v1118
      %1152 = vst.msk [vmem:[%s280 + $0x30] sm:$0xff] %vm1145, %v1120
      %1153 = vst.msk [vmem:[%s280 + $0x38] sm:$0xff] %vm1145, %v1122
      %1154 = vst.msk [vmem:[%s280 + $0x40] sm:$0xff] %vm1145, %v1124
      %1155 = vst.msk [vmem:[%s280 + $0x48] sm:$0xff] %vm1145, %v1126
      %1156 = vst.msk [vmem:[%s280 + $0x50] sm:$0xff] %vm1145, %v1128
      %1157 = vst.msk [vmem:[%s280 + $0x58] sm:$0xff] %vm1145, %v1130
      %1158 = vst.msk [vmem:[%s280 + $0x60] sm:$0xff] %vm1145, %v1132
      %1159 = vst.msk [vmem:[%s280 + $0x68] sm:$0xff] %vm1145, %v1134
      %1160 = vst.msk [vmem:[%s280 + $0x70] sm:$0xff] %vm1145, %v1136
      %1161 = vst.msk [vmem:[%s280 + $0x78] sm:$0xff] %vm1145, %v1138
      %1162 = vst.msk [vmem:[%s280 + $0x80] sm:$0xff] %vm1145, %v1140
      %1163 = vst.msk [vmem:[%s280 + $0x88] sm:$0xff] %vm1145, %v1142
      %1164 = vst.msk [vmem:[%s280 + $0x90] sm:$0xff] %vm1145, %v1144
      %s1165 = smul.u32 19, %s18
      %p1166 = scmp.lt.s32.totalorder %s1165, 37
      %s1167 = scalar_select %p1166, %s1165, 37
      %s1168 = smul.addr %s1167, 8
      %s1169 = scalar_lea.vmem %s7, %s1168
      // Predicated region
      $region49: #{tpu_custom_call.1} parent=47 // pred_check
        %p1170 = pneg %p188
      $region50: #{tpu_custom_call.1} parent=47 // pred_check_branch
        %1172 = sbr.rel (%p1170) target = $region52
      $region51: #{tpu_custom_call.1} parent=47 // pred_region
        %s1173 = smul.u32 19, %s18
      $region52: #{tpu_custom_call.1} parent=47 // pred_fallthru
        _
    $region48: #{tpu_custom_call.1} parent=5 // pred_fallthru
      _
    %p1174 = scmp.le.s32.totalorder 2, %s13
    // Predicated region
    $region53: #{tpu_custom_call.1} parent=5 // pred_check
      %p1175 = pneg %p1174
    $region54: #{tpu_custom_call.1} parent=5 // pred_check_branch
      %1177 = sbr.rel (%p1175) target = $region56
    $region55: #{tpu_custom_call.1} parent=5 // pred_region
      %s1178 = ssub.s32 %s13, 2
      // Predicated region
      $region57: #{tpu_custom_call.1} parent=55 // pred_check
        %p1179 = pneg %p194
      $region58: #{tpu_custom_call.1} parent=55 // pred_check_branch
        %1181 = sbr.rel (%p1179) target = $region60
      $region59: #{tpu_custom_call.1} parent=55 // pred_region
        %s1182 = smul.u32 19, %s19
        %p1183 = scmp.lt.s32.totalorder %s1182, 37
        %s1184 = scalar_select %p1183, %s1182, 37
        %s1185 = smul.addr %s1184, 8
        %s1186 = scalar_lea.vmem %s7, %s1185
      $region60: #{tpu_custom_call.1} parent=55 // pred_fallthru
        _
    $region56: #{tpu_custom_call.1} parent=5 // pred_fallthru
      _
  $region6: #{tpu_custom_call.1} parent=0 // loop_footer
    %s17 = sadd.s32 1, %s13
  $region7: #{tpu_custom_call.1} parent=0 // loop_footer_branch
    %12 = sbr.rel target = $region3
  $region8: #{tpu_custom_call.1} parent=0 // loop_exit
    _

</llo_original>
